<compile_context>
chip_gen: v7x
topology: tpu7x:2x2x1
jax: 0.10.0
libtpu: 0.0.40
codegen_flags: <defaults>
</compile_context>

<pallas_src>
import functools
import math

import jax
import jax.numpy as jnp
from jax.experimental import pallas as pl
from jax.experimental.pallas import tpu as pltpu


def _pe_dropout_kernel(seed_ref, x_ref, pe_ref, o_ref, *, p, apply_dropout,
                       seq_axis, batch_axis):
    # x_ref: (1, TS, D)   pe_ref: (TS, D)   o_ref: (1, TS, D)
    y = x_ref[...] + pe_ref[...][None, :, :]   # add in x's dtype (no f32 upcast)

    if apply_dropout and p > 0.0:
        ts, d = pe_ref.shape
        b_idx = pl.program_id(batch_axis)
        s_idx = pl.program_id(seq_axis)

        # Per-tile seed, decorrelated with large odd constants (scalar-unit math).
        tile_seed = (seed_ref[0].astype(jnp.uint32)
                     + b_idx.astype(jnp.uint32) * jnp.uint32(0x85EBCA6B)
                     + s_idx.astype(jnp.uint32) * jnp.uint32(0xC2B2AE35))

        # Per-element counter: disjoint bit-fields (row << 16 | col) inside the tile.
        row = jax.lax.broadcasted_iota(jnp.int32, (ts, d), 0).astype(jnp.uint32)
        col = jax.lax.broadcasted_iota(jnp.int32, (ts, d), 1).astype(jnp.uint32)
        h = tile_seed + (row << 16) + col

        # Multiply-free 32-bit integer mix (Jenkins/Wang); VPU add/xor/shift only,
        # lowers on Mosaic and in interpret mode (unlike pltpu.prng_*).
        h = (h + jnp.uint32(0x7ED55D16)) + (h << 12)
        h = (h ^ jnp.uint32(0xC761C23C)) ^ (h >> 19)
        h = (h + jnp.uint32(0x165667B1)) + (h << 5)
        h = (h + jnp.uint32(0xD3A2646C)) ^ (h << 9)
        h = (h + jnp.uint32(0xFD7046C5)) + (h << 3)
        h = (h ^ jnp.uint32(0xB55A4F09)) ^ (h >> 16)

        # Keep-test directly on raw bits: P(keep) = 1 - p.
        thresh = jnp.uint32(min(int(p * (1 << 32)), (1 << 32) - 1))
        keep = (h >= thresh)[None, :, :]
        scale = jnp.asarray(1.0 / (1.0 - p), dtype=y.dtype)
        y = jnp.where(keep, y * scale, jnp.zeros((), dtype=y.dtype))

    o_ref[...] = y.astype(o_ref.dtype)


def _choose_tile_s(S, D, x_itemsize, pe_itemsize, budget_bytes=16 * 1024 * 1024):
    """Largest legal seq tile whose live buffers fit a conservative VMEM budget."""
    # Sublane multiple for the narrowest dtype involved (8 for f32, 16 for bf16, ...).
    sub = max(8, 32 // min(x_itemsize, pe_itemsize))
    # Live bytes per seq row: x + out double-buffered, pe double-buffered.
    bytes_per_row = D * (4 * x_itemsize + 2 * pe_itemsize)
    max_rows = max(sub, budget_bytes // bytes_per_row)
    if S <= max_rows:
        return S                      # full axis is always a legal block dim
    t = min(1024, (max_rows // sub) * sub)
    return max(sub, min(t, S))


@functools.partial(jax.jit,
                   static_argnames=("p", "deterministic", "tile_s", "seq_major"))
def _pe_forward(x, pe, seed, *, p, deterministic, tile_s, seq_major):
    B, S, D = x.shape
    n_s = pl.cdiv(S, tile_s)
    apply_dropout = (not deterministic) and p > 0.0

    if seq_major:
        # Outer axis = seq tiles (>= 2 here): PE block index is constant across the
        # inner batch loop, so Pallas elides the repeated PE DMA (PE read once/tile).
        grid = (n_s, B)
        seq_axis, batch_axis = 0, 1
        x_map = lambda s, b, seed: (b, s, 0)
        pe_map = lambda s, b, seed: (s, 0)
    else:
        # S fits in one tile: keep B as the outer parallel axis (v7x 2-TC sharding);
        # PE block index is (0, 0) everywhere, so it is still fetched only once.
        grid = (B, n_s)
        seq_axis, batch_axis = 1, 0
        x_map = lambda b, s, seed: (b, s, 0)
        pe_map = lambda b, s, seed: (s, 0)

    kernel = functools.partial(
        _pe_dropout_kernel, p=p, apply_dropout=apply_dropout,
        seq_axis=seq_axis, batch_axis=batch_axis)

    return pl.pallas_call(
        kernel,
        out_shape=jax.ShapeDtypeStruct((B, S, D), x.dtype),
        grid_spec=pltpu.PrefetchScalarGridSpec(
            num_scalar_prefetch=1,                       # seed -> SMEM
            grid=grid,
            in_specs=[
                pl.BlockSpec((1, tile_s, D), x_map),     # x tile
                pl.BlockSpec((tile_s, D), pe_map),       # pe tile (reused across batch)
            ],
            out_specs=pl.BlockSpec((1, tile_s, D), x_map),
        ),
        compiler_params=pltpu.CompilerParams(
            dimension_semantics=("parallel", "arbitrary"),
            vmem_limit_bytes=32 * 1024 * 1024),
    )(seed, x, pe)


class PositionalEncoding:
    """JAX/Pallas equivalent of the PyTorch PositionalEncoding module."""

    def __init__(self, d_model: int, seq_len: int, dropout: float):
        self.d_model = d_model
        self.seq_len = seq_len
        self.p = float(dropout)
        position = jnp.arange(seq_len, dtype=jnp.float32)[:, None]
        div_term = jnp.exp(jnp.arange(0, d_model, 2, dtype=jnp.float32)
                           * (-math.log(1000.0) / d_model))   # log(1000) per the spec
        ang = position * div_term                              # (seq_len, d_model//2)
        pe = jnp.zeros((seq_len, d_model), jnp.float32)
        pe = pe.at[:, 0::2].set(jnp.sin(ang))
        pe = pe.at[:, 1::2].set(jnp.cos(ang))
        self.pe = pe                                           # built once, f32 master
        self._pe_by_dtype = {}                                 # cached casts to x dtype

    def __call__(self, x, *, deterministic=True, seed=0):
        B, S, D = x.shape
        assert D == self.d_model and S <= self.seq_len
        dt = jnp.dtype(x.dtype)
        pe = self._pe_by_dtype.get(dt)
        if pe is None:                                         # cast once, reuse
            pe = self.pe.astype(dt)
            self._pe_by_dtype[dt] = pe
        tile_s = _choose_tile_s(S, D, dt.itemsize, dt.itemsize)
        n_s = -(-S // tile_s)
        seed_arr = jnp.asarray([seed], dtype=jnp.int32)
        # TODO(synk): for d_model < 128 a wrapper-side reshape to a lane-dense
        # (tile_s*D/128, 128) layout would avoid masked partial stores.
        return _pe_forward(x, pe, seed_arr, p=self.p, deterministic=deterministic,
                           tile_s=tile_s, seq_major=(n_s >= 2))


if __name__ == "__main__":
    # Small shapes consistent with the module: (B, S, D)
    B, S, D = 2, 8, 32
    max_seq_len, dropout_p = 16, 0.1

    key = jax.random.PRNGKey(0)
    x = jax.random.normal(key, (B, S, D), jnp.float32)

    mod = PositionalEncoding(D, max_seq_len, dropout_p)

    # Eval mode (dropout disabled) -- exact check against the plain-JAX reference.
    out = jax.block_until_ready(mod(x, deterministic=True))
    ref = x + mod.pe[None, :S, :]
    assert out.shape == (B, S, D)
    assert jnp.allclose(out, ref, atol=1e-6, rtol=1e-6), "mismatch vs reference"

    # Training mode (dropout enabled) -- exercises the in-kernel mask generation.
    # RNG stream differs from torch; sanity-check statistics/shape only.
    out_tr = jax.block_until_ready(mod(x, deterministic=False, seed=1234))
    assert out_tr.shape == (B, S, D)
    assert bool(jnp.all(jnp.isfinite(out_tr)))
    dropped_frac = float(jnp.mean((out_tr == 0.0).astype(jnp.float32)))
    assert 0.0 <= dropped_frac <= 0.6  # loose check around p=0.1

    print("KERNEL_OK")
</pallas_src>

<mosaic_0001>
module attributes {stable_mosaic.version = 11 : i64} {
  func.func @_pe_dropout_kernel(%arg0: i32, %arg1: i32, %arg2: memref<1xi32, #tpu.memory_space<smem>>, %arg3: memref<1x8x32xf32, #tpu.memory_space<vmem>>, %arg4: memref<8x32xf32, #tpu.memory_space<vmem>>, %arg5: memref<1x8x32xf32, #tpu.memory_space<vmem>>) attributes {dimension_semantics = [#tpu.dimension_semantics<parallel>, #tpu.dimension_semantics<arbitrary>], iteration_bounds = array<i64: 2, 1>, scalar_prefetch = 1 : i64, scratch_operands = 0 : i64, tpu.core_type = #tpu.core_type<tc>, window_params = [{transform_indices = @transform_0, window_bounds = array<i64: 1, 8, 32>}, {transform_indices = @transform_1, window_bounds = array<i64: 8, 32>}, {transform_indices = @transform_2, window_bounds = array<i64: 1, 8, 32>}]} {
    %c0 = arith.constant 0 : index
    %c0_0 = arith.constant 0 : index
    %c0_1 = arith.constant 0 : index
    %0 = vector.load %arg3[%c0, %c0_0, %c0_1] : memref<1x8x32xf32, #tpu.memory_space<vmem>>, vector<1x8x32xf32>
    %c0_2 = arith.constant 0 : index
    %c0_3 = arith.constant 0 : index
    %1 = vector.load %arg4[%c0_2, %c0_3] : memref<8x32xf32, #tpu.memory_space<vmem>>, vector<8x32xf32>
    %2 = vector.shape_cast %1 : vector<8x32xf32> to vector<1x8x32xf32>
    %3 = arith.addf %0, %2 : vector<1x8x32xf32>
    %c0_4 = arith.constant 0 : index
    %c0_5 = arith.constant 0 : index
    %c0_6 = arith.constant 0 : index
    %4 = vector.load %arg5[%c0_4, %c0_5, %c0_6] : memref<1x8x32xf32, #tpu.memory_space<vmem>>, vector<1x8x32xf32>
    tpu.vector_store %arg5[%c0_4, %c0_5, %c0_6], %3 {strides = array<i32>} : memref<1x8x32xf32, #tpu.memory_space<vmem>>, vector<1x8x32xf32>,
    return
  }
  func.func @transform_0(%arg0: i32, %arg1: i32, %arg2: memref<1xi32, #tpu.memory_space<smem>>) -> (i32, i32, i32) {
    %c0_i32 = arith.constant 0 : i32
    %c0_i32_0 = arith.constant 0 : i32
    return %arg0, %arg1, %c0_i32 : i32, i32, i32
  }
  func.func @transform_1(%arg0: i32, %arg1: i32, %arg2: memref<1xi32, #tpu.memory_space<smem>>) -> (i32, i32) {
    %c0_i32 = arith.constant 0 : i32
    %c0_i32_0 = arith.constant 0 : i32
    return %arg1, %c0_i32 : i32, i32
  }
  func.func @transform_2(%arg0: i32, %arg1: i32, %arg2: memref<1xi32, #tpu.memory_space<smem>>) -> (i32, i32, i32) {
    %c0_i32 = arith.constant 0 : i32
    %c0_i32_0 = arith.constant 0 : i32
    return %arg0, %arg1, %c0_i32 : i32, i32, i32
  }
}

</mosaic_0001>

<llo_original>
// kernel: _pe_forward.1
$region0: #{_pe_forward.1}
  #allocation0 [shape = 'u32[]', space=smem, size = 0x4, offset = 0x4, fixed_abs, tag = 'smem constant byte address 0x4 - core index']
  #allocation1 [shape = 'u32[144,128]{1,0:T(1,128)}', space=vmem, size = 0x12000, scoped, tag = 'internal scratch']
  #allocation2 [shape = 's32[1]{0}', space=sflag, size = 0x4, scoped, tag = 'scoped memory for _pe_forward.1']
  #allocation3 [shape = 's32[1]{0:T(128)S(6)}', space=smem, size = 0x200, scoped, tag = 'prefetched SMEM operand 0']
  %s0 = inlined_call_operand.<no memory space> [shape: s32[1], index: 0, kind: input, shape index: {}]
  %s1 = inlined_call_operand.hbm [shape: f32[2,8,32], index: 1, kind: input, shape index: {}]
  %s2 = inlined_call_operand.hbm [shape: f32[16,32], index: 2, kind: input, shape index: {}]
  %s3 = inlined_call_operand.hbm [shape: f32[2,8,32], index: 3, kind: output, shape index: {}]
  %s4 = sld [smem:[#allocation0]]
  $region49: #{_pe_forward.1} parent=0
    _
  %s6 = ssub.s32 1, %s4
  %s7 = scalar_select 0, %s6, %s4
  %8 = sst [smem:[#allocation3]] %s0
  $region1: #{_pe_forward.1} parent=0
    #allocation4 [shape = 'u8[8192]{0}', space=vmem, size = 0x2000, scoped, tag = 'input window, operand 1']
    #allocation5 [shape = 's32[2]{0}', space=sflag, size = 0x8, scoped, tag = 'scoped memory for _pe_forward.1']
    #allocation6 [shape = 's32[2]{0}', space=sflag, size = 0x8, scoped, tag = 'scoped memory for _pe_forward.1']
    #allocation7 [shape = 'u8[4096]{0}', space=vmem, size = 0x1000, scoped, tag = 'input window, operand 2, single buffered']
    #allocation8 [shape = 's32[1]{0}', space=sflag, size = 0x4, scoped, tag = 'scoped memory for _pe_forward.1']
    #allocation9 [shape = 'u8[8192]{0}', space=vmem, size = 0x2000, scoped, tag = 'output window, operand 0']
    %9 = vsyncpa [#allocation5], 0
    %s10 = scalar_lea.sflag [#allocation5], 1
    %11 = vsyncpa %s10, 0
    %12 = vsyncpa [#allocation8], 0
    %13 = vsyncpa [#allocation6], 0
    %s14 = scalar_lea.sflag [#allocation6], 1
    %15 = vsyncpa %s14, 0
    loop: start=0, step=1, limit=4
    $region2: #{_pe_forward.1} parent=1 // loop_pre_header
      _
    $region3: #{_pe_forward.1} parent=1 // loop_header
      %s17 = sphi 0, %s21
      %p18 = scmp.ge.s32.totalorder %s17, 4
      %s24 = sphi 0, %s36
      %s25 = sphi 0, %s32
      %s26 = sphi 0, %s24
      %s27 = sphi 0, %s25
      %s28 = sphi 0, %s26
      %s29 = sphi 0, %s27
      %s41 = sphi 0, %s43
      %s44 = sphi 0, %s41
      %s45 = sphi 0, %s44
      %s61 = sphi 0, %s45
      %s67 = sphi 0, %s69
      %s70 = sphi 0, %s67
      %s71 = sphi 0, %s70
      %s87 = sphi 0, %s71
      %s95 = sphi 0, %s97
      %s98 = sphi 0, %s95
      %s99 = sphi 0, %s98
      %s115 = sphi 0, %s99
    $region4: #{_pe_forward.1} parent=1 // loop_header_branch
      %20 = sbr.rel (%p18) target = $region8
    $region5: #{_pe_forward.1} parent=1 // loop_body
      %s22 = ssub.s32 %s17, 1
      %s23 = ssub.s32 %s17, 2
      %s30 = sadd.s32 1, %s25
      %p31 = scmp.ge.s32.totalorder %s30, 1
      %s32 = scalar_select %p31, 0, %s30
      %s33 = sadd.s32 1, %s24
      %s34 = scalar_select %p31, %s33, %s24
      %p35 = scmp.ge.s32.totalorder %s34, 2
      %s36 = scalar_select %p35, 0, %s34
      %s37 = ssub.s32 %s24, %s36
      %s38 = ssub.s32 %s25, %s32
      %s39 = sor.u32 %s37, %s38
      %p40 = scmp.eq.s32.totalorder %s39, 0
      %s42 = sadd.s32 %s41, 1
      %s43 = scalar_select %p40, %s41, %s42
      %p46 = pneg %p40
      %p47 = scmp.eq.s32.totalorder %s17, 1
      %p48 = por %p46, %p47
      %p49 = scmp.ne.s32.totalorder %s41, %s44
      %p50 = scmp.eq.s32.totalorder %s17, 0
      %p51 = por %p49, %p50
      %p52 = scmp.ne.s32.totalorder %s41, %s44
      %p53 = scmp.eq.s32.totalorder %s22, 1
      %p54 = por %p52, %p53
      %p55 = scmp.ne.s32.totalorder %s44, %s45
      %p56 = scmp.eq.s32.totalorder %s22, 0
      %p57 = por %p55, %p56
      %p58 = scmp.ne.s32.totalorder %s44, %s45
      %p59 = scmp.eq.s32.totalorder %s23, 1
      %p60 = por %p58, %p59
      %p62 = scmp.ne.s32.totalorder %s45, %s61
      %p63 = scmp.eq.s32.totalorder %s23, 0
      %p64 = por %p62, %p63
      %s65 = ssub.s32 %s25, %s32
      %p66 = scmp.eq.s32.totalorder %s65, 0
      %s68 = sadd.s32 %s67, 1
      %s69 = scalar_select %p66, %s67, %s68
      %p72 = pneg %p66
      %p73 = scmp.eq.s32.totalorder %s17, 1
      %p74 = por %p72, %p73
      %p75 = scmp.ne.s32.totalorder %s67, %s70
      %p76 = scmp.eq.s32.totalorder %s17, 0
      %p77 = por %p75, %p76
      %p78 = scmp.ne.s32.totalorder %s67, %s70
      %p79 = scmp.eq.s32.totalorder %s22, 1
      %p80 = por %p78, %p79
      %p81 = scmp.ne.s32.totalorder %s70, %s71
      %p82 = scmp.eq.s32.totalorder %s22, 0
      %p83 = por %p81, %p82
      %p84 = scmp.ne.s32.totalorder %s70, %s71
      %p85 = scmp.eq.s32.totalorder %s23, 1
      %p86 = por %p84, %p85
      %p88 = scmp.ne.s32.totalorder %s71, %s87
      %p89 = scmp.eq.s32.totalorder %s23, 0
      %p90 = por %p88, %p89
      %s91 = ssub.s32 %s24, %s36
      %s92 = ssub.s32 %s25, %s32
      %s93 = sor.u32 %s91, %s92
      %p94 = scmp.eq.s32.totalorder %s93, 0
      %s96 = sadd.s32 %s95, 1
      %s97 = scalar_select %p94, %s95, %s96
      %p100 = pneg %p94
      %p101 = scmp.eq.s32.totalorder %s17, 1
      %p102 = por %p100, %p101
      %p103 = scmp.ne.s32.totalorder %s95, %s98
      %p104 = scmp.eq.s32.totalorder %s17, 0
      %p105 = por %p103, %p104
      %p106 = scmp.ne.s32.totalorder %s95, %s98
      %p107 = scmp.eq.s32.totalorder %s22, 1
      %p108 = por %p106, %p107
      %p109 = scmp.ne.s32.totalorder %s98, %s99
      %p110 = scmp.eq.s32.totalorder %s22, 0
      %p111 = por %p109, %p110
      %p112 = scmp.ne.s32.totalorder %s98, %s99
      %p113 = scmp.eq.s32.totalorder %s23, 1
      %p114 = por %p112, %p113
      %p116 = scmp.ne.s32.totalorder %s99, %s115
      %p117 = scmp.eq.s32.totalorder %s23, 0
      %p118 = por %p116, %p117
      %p119 = scmp.le.s32.totalorder 1, %s17
      %p120 = scmp.lt.s32.totalorder %s17, 3
      %p121 = pnand %p119, %p120
      %p122 = pneg %p121
      // Predicated region
      $region9: #{_pe_forward.1} parent=5 // pred_check
        _
      $region10: #{_pe_forward.1} parent=5 // pred_check_branch
        %124 = sbr.rel (%p121) target = $region12
      $region11: #{_pe_forward.1} parent=5 // pred_region
        %s125 = ssub.s32 %s17, 1
        // Predicated region
        $region13: #{_pe_forward.1} parent=11 // pred_check
          %p126 = pneg %p83
        $region14: #{_pe_forward.1} parent=11 // pred_check_branch
          %128 = sbr.rel (%p126) target = $region16
        $region15: #{_pe_forward.1} parent=11 // pred_region
          %s130 = ssub.s32 128, 128
          %131 = vsyncadd [#allocation8], %s130
          %s132 = smul.addr %s27, 128
          %s133 = scalar_lea.hbm %s2, %s132
          %s135 = sshll.u32 [#allocation7], 4
          %s136 = int_to_ptr.vmem [resolvable:$true] %s135
          %138 = dma.hbm_to_vmem [thread:$0]  %s133, 128, %s136, [#allocation8]
        $region16: #{_pe_forward.1} parent=11 // pred_fallthru
          _
      $region12: #{_pe_forward.1} parent=5 // pred_fallthru
        _
      %p139 = scmp.lt.s32.totalorder %s17, 2
      // Predicated region
      $region17: #{_pe_forward.1} parent=5 // pred_check
        %p140 = pneg %p139
      $region18: #{_pe_forward.1} parent=5 // pred_check_branch
        %142 = sbr.rel (%p140) target = $region20
      $region19: #{_pe_forward.1} parent=5 // pred_region
        // Predicated region
        $region21: #{_pe_forward.1} parent=19 // pred_check
          %p143 = pneg %p51
        $region22: #{_pe_forward.1} parent=19 // pred_check_branch
          %145 = sbr.rel (%p143) target = $region24
        $region23: #{_pe_forward.1} parent=19 // pred_region
          %s146 = sand.u32 %s41, 1
          %s147 = scalar_lea.sflag [#allocation5], %s146
          %s148 = sand.u32 %s41, 1
          %s149 = smul.addr %s148, 8
          %s150 = scalar_lea.vmem [#allocation4], %s149
          %s152 = ssub.s32 128, 128
          %153 = vsyncadd %s147, %s152
          %s154 = sadd.s32 %s25, %s24
          %s155 = smul.addr %s154, 128
          %s156 = scalar_lea.hbm %s1, %s155
          %s158 = sshll.u32 %s150, 4
          %s159 = int_to_ptr.vmem [resolvable:$true] %s158
          %161 = dma.hbm_to_vmem [thread:$0]  %s156, 128, %s159, %s147
        $region24: #{_pe_forward.1} parent=19 // pred_fallthru
          _
      $region20: #{_pe_forward.1} parent=5 // pred_fallthru
        _
      %p162 = scmp.le.s32.totalorder 1, %s17
      %p163 = scmp.lt.s32.totalorder %s17, 3
      %p164 = pnand %p162, %p163
      %p165 = pneg %p164
      // Predicated region
      $region25: #{_pe_forward.1} parent=5 // pred_check
        _
      $region26: #{_pe_forward.1} parent=5 // pred_check_branch
        %167 = sbr.rel (%p164) target = $region28
      $region27: #{_pe_forward.1} parent=5 // pred_region
        %s168 = ssub.s32 %s17, 1
        %s169 = sand.u32 %s44, 1
        %s170 = scalar_lea.sflag [#allocation5], %s169
        %s171 = sand.u32 %s44, 1
        %s172 = smul.addr %s171, 8
        %s173 = scalar_lea.vmem [#allocation4], %s172
        // Predicated region
        $region29: #{_pe_forward.1} parent=27 // pred_check
          %p174 = pneg %p57
        $region30: #{_pe_forward.1} parent=27 // pred_check_branch
          %176 = sbr.rel (%p174) target = $region32
        $region31: #{_pe_forward.1} parent=27 // pred_region
          %177 = dma.done %s170, 128
        $region32: #{_pe_forward.1} parent=27 // pred_fallthru
          _
        // Predicated region
        $region33: #{_pe_forward.1} parent=27 // pred_check
          %p178 = pneg %p83
        $region34: #{_pe_forward.1} parent=27 // pred_check_branch
          %180 = sbr.rel (%p178) target = $region36
        $region35: #{_pe_forward.1} parent=27 // pred_region
          %181 = dma.done [#allocation8], 128
        $region36: #{_pe_forward.1} parent=27 // pred_fallthru
          _
        %s182 = sand.u32 %s44, 1
        %s183 = scalar_lea.sflag [#allocation5], %s182
        %s184 = sand.u32 %s44, 1
        %s185 = smul.addr %s184, 8
        %s186 = scalar_lea.vmem [#allocation4], %s185
        %p187 = pneg %p57
        %p188 = pneg %p54
        %p189 = pneg %p83
        %p190 = pneg %p80
        %p191 = pneg %p111
        %p192 = pneg %p108
        %s193 = sand.u32 %s98, 1
        %s194 = scalar_lea.sflag [#allocation6], %s193
        %s195 = sand.u32 %s98, 1
        %s196 = smul.addr %s195, 8
        %s197 = scalar_lea.vmem [#allocation9], %s196
        %v198 = vld [vmem:[%s173] sm:$0xff]
        %v199 = vld [vmem:[#allocation7] sm:$0xff]
        %v200 = vadd.f32 %v198, %v199
        %vm201 = vcmask 261120
        %202 = vst.msk [vmem:[%s197] sm:$0xff] %vm201, %v200
        %s203 = sand.u32 %s98, 1
        %s204 = scalar_lea.sflag [#allocation6], %s203
        %s205 = sand.u32 %s98, 1
        %s206 = smul.addr %s205, 8
        %s207 = scalar_lea.vmem [#allocation9], %s206
        // Predicated region
        $region37: #{_pe_forward.1} parent=27 // pred_check
          %p208 = pneg %p108
        $region38: #{_pe_forward.1} parent=27 // pred_check_branch
          %210 = sbr.rel (%p208) target = $region40
        $region39: #{_pe_forward.1} parent=27 // pred_region
          %s212 = ssub.s32 128, 128
          %213 = vsyncadd %s204, %s212
          %s214 = sadd.s32 %s27, %s26
          %s215 = smul.addr %s214, 128
          %s216 = scalar_lea.hbm %s3, %s215
          %s218 = sshll.u32 %s207, 4
          %s219 = int_to_ptr.vmem [resolvable:$true] %s218
          %221 = dma.vmem_to_hbm [thread:$0]  %s219, 128, %s216, %s204
        $region40: #{_pe_forward.1} parent=27 // pred_fallthru
          _
      $region28: #{_pe_forward.1} parent=5 // pred_fallthru
        _
      %p222 = scmp.le.s32.totalorder 2, %s17
      // Predicated region
      $region41: #{_pe_forward.1} parent=5 // pred_check
        %p223 = pneg %p222
      $region42: #{_pe_forward.1} parent=5 // pred_check_branch
        %225 = sbr.rel (%p223) target = $region44
      $region43: #{_pe_forward.1} parent=5 // pred_region
        %s226 = ssub.s32 %s17, 2
        // Predicated region
        $region45: #{_pe_forward.1} parent=43 // pred_check
          %p227 = pneg %p114
        $region46: #{_pe_forward.1} parent=43 // pred_check_branch
          %229 = sbr.rel (%p227) target = $region48
        $region47: #{_pe_forward.1} parent=43 // pred_region
          %s230 = sand.u32 %s99, 1
          %s231 = scalar_lea.sflag [#allocation6], %s230
          %s232 = sand.u32 %s99, 1
          %s233 = smul.addr %s232, 8
          %s234 = scalar_lea.vmem [#allocation9], %s233
          %235 = dma.done %s231, 128
        $region48: #{_pe_forward.1} parent=43 // pred_fallthru
          _
      $region44: #{_pe_forward.1} parent=5 // pred_fallthru
        _
    $region6: #{_pe_forward.1} parent=1 // loop_footer
      %s21 = sadd.s32 1, %s17
    $region7: #{_pe_forward.1} parent=1 // loop_footer_branch
      %16 = sbr.rel target = $region3
    $region8: #{_pe_forward.1} parent=1 // loop_exit
      _
    %236 = vsyncpa [#allocation5], 1
    %s237 = scalar_lea.sflag [#allocation5], 1
    %238 = vsyncpa %s237, 1
    %239 = vsyncpa [#allocation8], 1
    %240 = vsyncpa [#allocation6], 1
    %s241 = scalar_lea.sflag [#allocation6], 1
    %242 = vsyncpa %s241, 1

</llo_original>
